<compile_context>
chip_gen: v5e
topology: v5e:2x2
jax: 0.10.0
libtpu: 0.0.40
codegen_flags: <defaults>
</compile_context>

<pallas_src>
import functools

import jax
import jax.numpy as jnp
import numpy as np
from jax.experimental import pallas as pl
from jax.experimental.pallas import tpu as pltpu


def _fused_dwsep_kernel(x_ref, wdw_ref, b1_ref, wpw_ref, b2_ref, o_ref,
                        *, K, S2, Hq, H2, W2):
    # x_ref:   (1, S2*S2*Hq, Wq, C_in)  phase-deinterleaved input, one batch element.
    #          Row (rh, rw, qh) of the phase grid lives at flat row (rh*S2+rw)*Hq+qh.
    # wdw_ref: (K, K, C_in)             depthwise filters, BN1 scale pre-folded.
    # b1_ref:  (1, C_in)                fused BN1 shift (incl. conv bias).
    # wpw_ref: (C_in, C_out)            1x1 conv weights, BN2 scale pre-folded.
    # b2_ref:  (1, C_out)               fused BN2 shift (incl. conv bias).
    # o_ref:   (1, H2*W2, C_out)        final output pixels (flattened spatial).
    C_in = x_ref.shape[-1]

    # ---- depthwise KxK conv at combined stride S*S (contiguous, unstrided reads) ------
    acc = jnp.zeros((H2, W2, C_in), jnp.float32)
    for kh in range(K):                          # static, fully unrolled
        rh, qh = kh % S2, kh // S2
        for kw in range(K):
            rw, qw = kw % S2, kw // S2
            row0 = (rh * S2 + rw) * Hq + qh      # static Python int
            patch = x_ref[0, pl.ds(row0, H2), pl.ds(qw, W2), :].astype(jnp.float32)
            wk = wdw_ref[kh, kw, :].reshape(1, 1, C_in).astype(jnp.float32)
            acc = acc + patch * wk

    # ---- BN1 shift + ReLU (scale already folded into weights; stays in VMEM) ----------
    dw = jnp.maximum(acc + b1_ref[...], 0.0)                              # (H2, W2, C_in)

    # ---- 1x1 conv (MXU matmul) + BN2 shift + ReLU epilogue ----------------------------
    dw2 = dw.reshape(H2 * W2, C_in).astype(wpw_ref.dtype)
    y = jnp.dot(dw2, wpw_ref[...], preferred_element_type=jnp.float32)    # (H2*W2, C_out)
    y = jnp.maximum(y + b2_ref[...], 0.0)
    o_ref[0] = y.astype(o_ref.dtype)


def depthwise_separable_conv(x_nchw, params, *, kernel_size, stride, eps=1e-5,
                             compute_dtype=jnp.float32):
    (w_dw, b_dw, g1, beta1, mean1, var1,
     w_pw, b_pw, g2, beta2, mean2, var2) = params
    N, C_in, H, W = x_nchw.shape
    K, S = kernel_size, stride
    C_out = w_pw.shape[0]
    S2 = S * S

    # Output sizes: depthwise (valid, stride S) then pointwise 1x1 (stride S).
    Hd = (H - K) // S + 1
    Wd = (W - K) // S + 1
    H2 = (Hd - 1) // S + 1
    W2 = (Wd - 1) // S + 1

    # Phase-deinterleaved layout: raw index h = S2*q + r.  For kernel offset kh the taps
    # are phase r = kh % S2, q in [kh//S2, kh//S2 + H2) -> a contiguous slice.
    Hq = (K - 1) // S2 + H2
    Wq = (K - 1) // S2 + W2
    H_pad, W_pad = Hq * S2, Wq * S2

    x = x_nchw.astype(compute_dtype)
    # Pad or trim H/W to the phase grid. Padded zeros are never read (max raw index
    # accessed is (K-1) + S2*(H2-1) <= H-1); trimmed rows are never needed.
    if H_pad >= H:
        x = jnp.pad(x, ((0, 0), (0, 0), (0, H_pad - H), (0, 0)))
    else:
        x = x[:, :, :H_pad, :]
    if W_pad >= W:
        x = jnp.pad(x, ((0, 0), (0, 0), (0, 0), (0, W_pad - W)))
    else:
        x = x[:, :, :, :W_pad]
    # Single layout pass: NCHW -> (N, rh, rw, qh, qw, C) -> flatten leading phase dims.
    x = x.reshape(N, C_in, Hq, S2, Wq, S2)
    x = jnp.transpose(x, (0, 3, 5, 2, 4, 1))          # (N, S2, S2, Hq, Wq, C_in)
    x = x.reshape(N, S2 * S2 * Hq, Wq, C_in)

    # Fold BN (inference) scale into the conv weights; keep only per-channel shifts.
    s1 = g1 / jnp.sqrt(var1 + eps)
    w_dw_hwc = (jnp.transpose(w_dw[:, 0, :, :], (1, 2, 0)) * s1[None, None, :]
                ).astype(compute_dtype)                                   # (K, K, C_in)
    shift1 = (s1 * (b_dw - mean1) + beta1).reshape(1, C_in).astype(jnp.float32)

    s2 = g2 / jnp.sqrt(var2 + eps)
    w_pw_mat = (jnp.transpose(w_pw[:, :, 0, 0], (1, 0)) * s2[None, :]
                ).astype(compute_dtype)                                   # (C_in, C_out)
    shift2 = (s2 * (b_pw - mean2) + beta2).reshape(1, C_out).astype(jnp.float32)

    out_flat = pl.pallas_call(
        functools.partial(_fused_dwsep_kernel, K=K, S2=S2, Hq=Hq, H2=H2, W2=W2),
        out_shape=jax.ShapeDtypeStruct((N, H2 * W2, C_out), jnp.float32),
        grid=(N,),
        in_specs=[
            pl.BlockSpec((1, S2 * S2 * Hq, Wq, C_in), lambda n: (n, 0, 0, 0)),  # x
            pl.BlockSpec((K, K, C_in), lambda n: (0, 0, 0)),                    # w_dw
            pl.BlockSpec((1, C_in), lambda n: (0, 0)),                          # shift1
            pl.BlockSpec((C_in, C_out), lambda n: (0, 0)),                      # w_pw
            pl.BlockSpec((1, C_out), lambda n: (0, 0)),                         # shift2
        ],
        out_specs=pl.BlockSpec((1, H2 * W2, C_out), lambda n: (n, 0, 0)),
        compiler_params=pltpu.CompilerParams(dimension_semantics=("parallel",)),
    )(x, w_dw_hwc, shift1, w_pw_mat, shift2)

    out = out_flat.reshape(N, H2, W2, C_out)
    return jnp.transpose(out, (0, 3, 1, 2))                                 # -> NCHW


def _reference(x_nchw, params, kernel_size, stride, eps=1e-5):
    """Pure-JAX reference (matches PyTorch eval-mode forward of the module)."""
    (w_dw, b_dw, g1, beta1, mean1, var1,
     w_pw, b_pw, g2, beta2, mean2, var2) = params
    C_in = x_nchw.shape[1]

    def bn(z, g, b, m, v):
        sh = (1, -1, 1, 1)
        return (z - m.reshape(sh)) / jnp.sqrt(v.reshape(sh) + eps) * g.reshape(sh) + b.reshape(sh)

    y = jax.lax.conv_general_dilated(
        x_nchw, w_dw, window_strides=(stride, stride), padding="VALID",
        feature_group_count=C_in, dimension_numbers=("NCHW", "OIHW", "NCHW"))
    y = jnp.maximum(bn(y + b_dw.reshape(1, -1, 1, 1), g1, beta1, mean1, var1), 0.0)
    z = jax.lax.conv_general_dilated(
        y, w_pw, window_strides=(stride, stride), padding="VALID",
        dimension_numbers=("NCHW", "OIHW", "NCHW"))
    z = jnp.maximum(bn(z + b_pw.reshape(1, -1, 1, 1), g2, beta2, mean2, var2), 0.0)
    return z


if __name__ == "__main__":
    key = jax.random.PRNGKey(0)
    keys = jax.random.split(key, 13)

    N, C_in, H, W = 2, 4, 16, 16
    C_out, K, S = 8, 3, 2

    x = jax.random.normal(keys[0], (N, C_in, H, W), jnp.float32)

    # Deterministic parameter init (shapes per the module's __init__).
    w_dw = 0.3 * jax.random.normal(keys[1], (C_in, 1, K, K), jnp.float32)      # grouped conv
    b_dw = 0.1 * jax.random.normal(keys[2], (C_in,), jnp.float32)
    g1 = 1.0 + 0.1 * jax.random.normal(keys[3], (C_in,), jnp.float32)          # BN1 (inference)
    beta1 = 0.1 * jax.random.normal(keys[4], (C_in,), jnp.float32)
    mean1 = 0.1 * jax.random.normal(keys[5], (C_in,), jnp.float32)
    var1 = 0.5 + jax.random.uniform(keys[6], (C_in,), jnp.float32)
    w_pw = 0.3 * jax.random.normal(keys[7], (C_out, C_in, 1, 1), jnp.float32)  # 1x1 conv
    b_pw = 0.1 * jax.random.normal(keys[8], (C_out,), jnp.float32)
    g2 = 1.0 + 0.1 * jax.random.normal(keys[9], (C_out,), jnp.float32)         # BN2 (inference)
    beta2 = 0.1 * jax.random.normal(keys[10], (C_out,), jnp.float32)
    mean2 = 0.1 * jax.random.normal(keys[11], (C_out,), jnp.float32)
    var2 = 0.5 + jax.random.uniform(keys[12], (C_out,), jnp.float32)

    params = (w_dw, b_dw, g1, beta1, mean1, var1,
              w_pw, b_pw, g2, beta2, mean2, var2)

    out = depthwise_separable_conv(x, params, kernel_size=K, stride=S)
    out = jax.block_until_ready(out)

    ref = _reference(x, params, K, S)
    np.testing.assert_allclose(np.asarray(out), np.asarray(ref), rtol=1e-4, atol=1e-4)

    print("KERNEL_OK")
</pallas_src>

<mosaic_0001>
module attributes {stable_mosaic.version = 11 : i64} {
  func.func @_fused_dwsep_kernel(%arg0: i32, %arg1: memref<1x64x4x4xf32, #tpu.memory_space<vmem>>, %arg2: memref<3x3x4xf32, #tpu.memory_space<vmem>>, %arg3: memref<1x4xf32, #tpu.memory_space<vmem>>, %arg4: memref<4x8xf32, #tpu.memory_space<vmem>>, %arg5: memref<1x8xf32, #tpu.memory_space<vmem>>, %arg6: memref<1x16x8xf32, #tpu.memory_space<vmem>>) attributes {dimension_semantics = [#tpu.dimension_semantics<parallel>], iteration_bounds = array<i64: 2>, scalar_prefetch = 0 : i64, scratch_operands = 0 : i64, tpu.core_type = #tpu.core_type<tc>, window_params = [{transform_indices = @transform_0, window_bounds = array<i64: 1, 64, 4, 4>}, {pipeline_mode = #tpu.pipeline_mode<synchronous>, transform_indices = @transform_1, window_bounds = array<i64: 3, 3, 4>}, {pipeline_mode = #tpu.pipeline_mode<synchronous>, transform_indices = @transform_2, window_bounds = array<i64: 1, 4>}, {pipeline_mode = #tpu.pipeline_mode<synchronous>, transform_indices = @transform_3, window_bounds = array<i64: 4, 8>}, {pipeline_mode = #tpu.pipeline_mode<synchronous>, transform_indices = @transform_4, window_bounds = array<i64: 1, 8>}, {transform_indices = @transform_5, window_bounds = array<i64: 1, 16, 8>}]} {
    %cst = arith.constant 0.000000e+00 : f32
    %0 = vector.broadcast %cst : f32 to vector<4x4x4xf32>
    %c0 = arith.constant 0 : index
    %c0_0 = arith.constant 0 : index
    %c0_1 = arith.constant 0 : index
    %c0_2 = arith.constant 0 : index
    %1 = vector.load %arg1[%c0, %c0_0, %c0_1, %c0_2] : memref<1x64x4x4xf32, #tpu.memory_space<vmem>>, vector<1x4x4x4xf32>
    %2 = vector.shape_cast %1 : vector<1x4x4x4xf32> to vector<4x4x4xf32>
    %c0_3 = arith.constant 0 : index
    %c0_4 = arith.constant 0 : index
    %c0_5 = arith.constant 0 : index
    %3 = vector.load %arg2[%c0_3, %c0_4, %c0_5] : memref<3x3x4xf32, #tpu.memory_space<vmem>>, vector<1x1x4xf32>
    %4 = vector.shape_cast %3 : vector<1x1x4xf32> to vector<4xf32>
    %5 = vector.shape_cast %4 : vector<4xf32> to vector<1x1x4xf32>
    %6 = vector.broadcast %5 : vector<1x1x4xf32> to vector<4x4x4xf32>
    %7 = arith.mulf %2, %6 : vector<4x4x4xf32>
    %8 = arith.addf %0, %7 : vector<4x4x4xf32>
    %c0_6 = arith.constant 0 : index
    %c4 = arith.constant 4 : index
    %c0_7 = arith.constant 0 : index
    %c0_8 = arith.constant 0 : index
    %9 = vector.load %arg1[%c0_6, %c4, %c0_7, %c0_8] : memref<1x64x4x4xf32, #tpu.memory_space<vmem>>, vector<1x4x4x4xf32>
    %10 = vector.shape_cast %9 : vector<1x4x4x4xf32> to vector<4x4x4xf32>
    %c0_9 = arith.constant 0 : index
    %c1 = arith.constant 1 : index
    %c0_10 = arith.constant 0 : index
    %11 = vector.load %arg2[%c0_9, %c1, %c0_10] : memref<3x3x4xf32, #tpu.memory_space<vmem>>, vector<1x1x4xf32>
    %12 = vector.shape_cast %11 : vector<1x1x4xf32> to vector<4xf32>
    %13 = vector.shape_cast %12 : vector<4xf32> to vector<1x1x4xf32>
    %14 = vector.broadcast %13 : vector<1x1x4xf32> to vector<4x4x4xf32>
    %15 = arith.mulf %10, %14 : vector<4x4x4xf32>
    %16 = arith.addf %8, %15 : vector<4x4x4xf32>
    %c0_11 = arith.constant 0 : index
    %c8 = arith.constant 8 : index
    %c0_12 = arith.constant 0 : index
    %c0_13 = arith.constant 0 : index
    %17 = vector.load %arg1[%c0_11, %c8, %c0_12, %c0_13] : memref<1x64x4x4xf32, #tpu.memory_space<vmem>>, vector<1x4x4x4xf32>
    %18 = vector.shape_cast %17 : vector<1x4x4x4xf32> to vector<4x4x4xf32>
    %c0_14 = arith.constant 0 : index
    %c2 = arith.constant 2 : index
    %c0_15 = arith.constant 0 : index
    %19 = vector.load %arg2[%c0_14, %c2, %c0_15] : memref<3x3x4xf32, #tpu.memory_space<vmem>>, vector<1x1x4xf32>
    %20 = vector.shape_cast %19 : vector<1x1x4xf32> to vector<4xf32>
    %21 = vector.shape_cast %20 : vector<4xf32> to vector<1x1x4xf32>
    %22 = vector.broadcast %21 : vector<1x1x4xf32> to vector<4x4x4xf32>
    %23 = arith.mulf %18, %22 : vector<4x4x4xf32>
    %24 = arith.addf %16, %23 : vector<4x4x4xf32>
    %c0_16 = arith.constant 0 : index
    %c16 = arith.constant 16 : index
    %c0_17 = arith.constant 0 : index
    %c0_18 = arith.constant 0 : index
    %25 = vector.load %arg1[%c0_16, %c16, %c0_17, %c0_18] : memref<1x64x4x4xf32, #tpu.memory_space<vmem>>, vector<1x4x4x4xf32>
    %26 = vector.shape_cast %25 : vector<1x4x4x4xf32> to vector<4x4x4xf32>
    %c1_19 = arith.constant 1 : index
    %c0_20 = arith.constant 0 : index
    %c0_21 = arith.constant 0 : index
    %27 = vector.load %arg2[%c1_19, %c0_20, %c0_21] : memref<3x3x4xf32, #tpu.memory_space<vmem>>, vector<1x1x4xf32>
    %28 = vector.shape_cast %27 : vector<1x1x4xf32> to vector<4xf32>
    %29 = vector.shape_cast %28 : vector<4xf32> to vector<1x1x4xf32>
    %30 = vector.broadcast %29 : vector<1x1x4xf32> to vector<4x4x4xf32>
    %31 = arith.mulf %26, %30 : vector<4x4x4xf32>
    %32 = arith.addf %24, %31 : vector<4x4x4xf32>
    %c0_22 = arith.constant 0 : index
    %c20 = arith.constant 20 : index
    %c0_23 = arith.constant 0 : index
    %c0_24 = arith.constant 0 : index
    %33 = vector.load %arg1[%c0_22, %c20, %c0_23, %c0_24] : memref<1x64x4x4xf32, #tpu.memory_space<vmem>>, vector<1x4x4x4xf32>
    %34 = vector.shape_cast %33 : vector<1x4x4x4xf32> to vector<4x4x4xf32>
    %c1_25 = arith.constant 1 : index
    %c1_26 = arith.constant 1 : index
    %c0_27 = arith.constant 0 : index
    %35 = vector.load %arg2[%c1_25, %c1_26, %c0_27] : memref<3x3x4xf32, #tpu.memory_space<vmem>>, vector<1x1x4xf32>
    %36 = vector.shape_cast %35 : vector<1x1x4xf32> to vector<4xf32>
    %37 = vector.shape_cast %36 : vector<4xf32> to vector<1x1x4xf32>
    %38 = vector.broadcast %37 : vector<1x1x4xf32> to vector<4x4x4xf32>
    %39 = arith.mulf %34, %38 : vector<4x4x4xf32>
    %40 = arith.addf %32, %39 : vector<4x4x4xf32>
    %c0_28 = arith.constant 0 : index
    %c24 = arith.constant 24 : index
    %c0_29 = arith.constant 0 : index
    %c0_30 = arith.constant 0 : index
    %41 = vector.load %arg1[%c0_28, %c24, %c0_29, %c0_30] : memref<1x64x4x4xf32, #tpu.memory_space<vmem>>, vector<1x4x4x4xf32>
    %42 = vector.shape_cast %41 : vector<1x4x4x4xf32> to vector<4x4x4xf32>
    %c1_31 = arith.constant 1 : index
    %c2_32 = arith.constant 2 : index
    %c0_33 = arith.constant 0 : index
    %43 = vector.load %arg2[%c1_31, %c2_32, %c0_33] : memref<3x3x4xf32, #tpu.memory_space<vmem>>, vector<1x1x4xf32>
    %44 = vector.shape_cast %43 : vector<1x1x4xf32> to vector<4xf32>
    %45 = vector.shape_cast %44 : vector<4xf32> to vector<1x1x4xf32>
    %46 = vector.broadcast %45 : vector<1x1x4xf32> to vector<4x4x4xf32>
    %47 = arith.mulf %42, %46 : vector<4x4x4xf32>
    %48 = arith.addf %40, %47 : vector<4x4x4xf32>
    %c0_34 = arith.constant 0 : index
    %c32 = arith.constant 32 : index
    %c0_35 = arith.constant 0 : index
    %c0_36 = arith.constant 0 : index
    %49 = vector.load %arg1[%c0_34, %c32, %c0_35, %c0_36] : memref<1x64x4x4xf32, #tpu.memory_space<vmem>>, vector<1x4x4x4xf32>
    %50 = vector.shape_cast %49 : vector<1x4x4x4xf32> to vector<4x4x4xf32>
    %c2_37 = arith.constant 2 : index
    %c0_38 = arith.constant 0 : index
    %c0_39 = arith.constant 0 : index
    %51 = vector.load %arg2[%c2_37, %c0_38, %c0_39] : memref<3x3x4xf32, #tpu.memory_space<vmem>>, vector<1x1x4xf32>
    %52 = vector.shape_cast %51 : vector<1x1x4xf32> to vector<4xf32>
    %53 = vector.shape_cast %52 : vector<4xf32> to vector<1x1x4xf32>
    %54 = vector.broadcast %53 : vector<1x1x4xf32> to vector<4x4x4xf32>
    %55 = arith.mulf %50, %54 : vector<4x4x4xf32>
    %56 = arith.addf %48, %55 : vector<4x4x4xf32>
    %c0_40 = arith.constant 0 : index
    %c36 = arith.constant 36 : index
    %c0_41 = arith.constant 0 : index
    %c0_42 = arith.constant 0 : index
    %57 = vector.load %arg1[%c0_40, %c36, %c0_41, %c0_42] : memref<1x64x4x4xf32, #tpu.memory_space<vmem>>, vector<1x4x4x4xf32>
    %58 = vector.shape_cast %57 : vector<1x4x4x4xf32> to vector<4x4x4xf32>
    %c2_43 = arith.constant 2 : index
    %c1_44 = arith.constant 1 : index
    %c0_45 = arith.constant 0 : index
    %59 = vector.load %arg2[%c2_43, %c1_44, %c0_45] : memref<3x3x4xf32, #tpu.memory_space<vmem>>, vector<1x1x4xf32>
    %60 = vector.shape_cast %59 : vector<1x1x4xf32> to vector<4xf32>
    %61 = vector.shape_cast %60 : vector<4xf32> to vector<1x1x4xf32>
    %62 = vector.broadcast %61 : vector<1x1x4xf32> to vector<4x4x4xf32>
    %63 = arith.mulf %58, %62 : vector<4x4x4xf32>
    %64 = arith.addf %56, %63 : vector<4x4x4xf32>
    %c0_46 = arith.constant 0 : index
    %c40 = arith.constant 40 : index
    %c0_47 = arith.constant 0 : index
    %c0_48 = arith.constant 0 : index
    %65 = vector.load %arg1[%c0_46, %c40, %c0_47, %c0_48] : memref<1x64x4x4xf32, #tpu.memory_space<vmem>>, vector<1x4x4x4xf32>
    %66 = vector.shape_cast %65 : vector<1x4x4x4xf32> to vector<4x4x4xf32>
    %c2_49 = arith.constant 2 : index
    %c2_50 = arith.constant 2 : index
    %c0_51 = arith.constant 0 : index
    %67 = vector.load %arg2[%c2_49, %c2_50, %c0_51] : memref<3x3x4xf32, #tpu.memory_space<vmem>>, vector<1x1x4xf32>
    %68 = vector.shape_cast %67 : vector<1x1x4xf32> to vector<4xf32>
    %69 = vector.shape_cast %68 : vector<4xf32> to vector<1x1x4xf32>
    %70 = vector.broadcast %69 : vector<1x1x4xf32> to vector<4x4x4xf32>
    %71 = arith.mulf %66, %70 : vector<4x4x4xf32>
    %72 = arith.addf %64, %71 : vector<4x4x4xf32>
    %c0_52 = arith.constant 0 : index
    %c0_53 = arith.constant 0 : index
    %73 = vector.load %arg3[%c0_52, %c0_53] : memref<1x4xf32, #tpu.memory_space<vmem>>, vector<1x4xf32>
    %74 = vector.shape_cast %73 : vector<1x4xf32> to vector<1x1x4xf32>
    %75 = vector.broadcast %74 : vector<1x1x4xf32> to vector<4x4x4xf32>
    %76 = arith.addf %72, %75 : vector<4x4x4xf32>
    %cst_54 = arith.constant 0.000000e+00 : f32
    %77 = vector.broadcast %cst_54 : f32 to vector<4x4x4xf32>
    %78 = arith.maximumf %76, %77 : vector<4x4x4xf32>
    %79 = vector.shape_cast %78 : vector<4x4x4xf32> to vector<16x4xf32>
    %c0_55 = arith.constant 0 : index
    %c0_56 = arith.constant 0 : index
    %80 = vector.load %arg4[%c0_55, %c0_56] : memref<4x8xf32, #tpu.memory_space<vmem>>, vector<4x8xf32>
    %cst_57 = arith.constant dense<0.000000e+00> : vector<16x8xf32>
    %81 = tpu.matmul %79, %80, %cst_57 {dimension_numbers = #tpu.dot_dimension_numbers<[1], [0], [0], [1], [0, 0, 1, 1], [], []>} : vector<16x4xf32>, vector<4x8xf32>, vector<16x8xf32> -> vector<16x8xf32>
    %c0_58 = arith.constant 0 : index
    %c0_59 = arith.constant 0 : index
    %82 = vector.load %arg5[%c0_58, %c0_59] : memref<1x8xf32, #tpu.memory_space<vmem>>, vector<1x8xf32>
    %83 = vector.broadcast %82 : vector<1x8xf32> to vector<16x8xf32>
    %84 = arith.addf %81, %83 : vector<16x8xf32>
    %cst_60 = arith.constant 0.000000e+00 : f32
    %85 = vector.broadcast %cst_60 : f32 to vector<16x8xf32>
    %86 = arith.maximumf %84, %85 : vector<16x8xf32>
    %c0_61 = arith.constant 0 : index
    %c0_62 = arith.constant 0 : index
    %c0_63 = arith.constant 0 : index
    %87 = vector.load %arg6[%c0_61, %c0_62, %c0_63] : memref<1x16x8xf32, #tpu.memory_space<vmem>>, vector<1x16x8xf32>
    %88 = vector.shape_cast %87 : vector<1x16x8xf32> to vector<16x8xf32>
    %89 = vector.shape_cast %86 : vector<16x8xf32> to vector<1x16x8xf32>
    tpu.vector_store %arg6[%c0_61, %c0_62, %c0_63], %89 {strides = array<i32>} : memref<1x16x8xf32, #tpu.memory_space<vmem>>, vector<1x16x8xf32>,
    return
  }
  func.func @transform_0(%arg0: i32) -> (i32, i32, i32, i32) {
    %c0_i32 = arith.constant 0 : i32
    %c0_i32_0 = arith.constant 0 : i32
    %c0_i32_1 = arith.constant 0 : i32
    %c0_i32_2 = arith.constant 0 : i32
    return %arg0, %c0_i32, %c0_i32_0, %c0_i32_1 : i32, i32, i32, i32
  }
  func.func @transform_1(%arg0: i32) -> (i32, i32, i32) {
    %c0_i32 = arith.constant 0 : i32
    %c0_i32_0 = arith.constant 0 : i32
    %c0_i32_1 = arith.constant 0 : i32
    %c0_i32_2 = arith.constant 0 : i32
    return %c0_i32, %c0_i32_0, %c0_i32_1 : i32, i32, i32
  }
  func.func @transform_2(%arg0: i32) -> (i32, i32) {
    %c0_i32 = arith.constant 0 : i32
    %c0_i32_0 = arith.constant 0 : i32
    %c0_i32_1 = arith.constant 0 : i32
    return %c0_i32, %c0_i32_0 : i32, i32
  }
  func.func @transform_3(%arg0: i32) -> (i32, i32) {
    %c0_i32 = arith.constant 0 : i32
    %c0_i32_0 = arith.constant 0 : i32
    %c0_i32_1 = arith.constant 0 : i32
    return %c0_i32, %c0_i32_0 : i32, i32
  }
  func.func @transform_4(%arg0: i32) -> (i32, i32) {
    %c0_i32 = arith.constant 0 : i32
    %c0_i32_0 = arith.constant 0 : i32
    %c0_i32_1 = arith.constant 0 : i32
    return %c0_i32, %c0_i32_0 : i32, i32
  }
  func.func @transform_5(%arg0: i32) -> (i32, i32, i32) {
    %c0_i32 = arith.constant 0 : i32
    %c0_i32_0 = arith.constant 0 : i32
    %c0_i32_1 = arith.constant 0 : i32
    return %arg0, %c0_i32, %c0_i32_0 : i32, i32, i32
  }
}

</mosaic_0001>

<llo_original>
// kernel: tpu_custom_call.1
$region0: #{tpu_custom_call.1}
  #allocation0 [shape = 'u32[]', space=smem, size = 0x4, offset = 0x4, fixed_abs, tag = 'smem constant byte address 0x4 - core index']
  #allocation1 [shape = 'u32[72,128]{1,0:T(1,128)}', space=vmem, size = 0x9000, scoped, tag = 'internal scratch']
  %s0 = inlined_call_operand.vmem [shape: f32[2,64,4,4], index: 0, kind: input, shape index: {}]
  %s1 = inlined_call_operand.vmem [shape: f32[3,3,4], index: 1, kind: input, shape index: {}]
  %s2 = inlined_call_operand.vmem [shape: f32[1,4], index: 2, kind: input, shape index: {}]
  %s3 = inlined_call_operand.vmem [shape: f32[4,8], index: 3, kind: input, shape index: {}]
  %s4 = inlined_call_operand.vmem [shape: f32[1,8], index: 4, kind: input, shape index: {}]
  %s5 = inlined_call_operand.vmem [shape: f32[2,16,8], index: 5, kind: output, shape index: {}]
  %s6 = sld [smem:[#allocation0]]
  $region53: #{tpu_custom_call.1} parent=0
    _
  %s8 = ssub.s32 1, %s6
  %s9 = scalar_select 0, %s8, %s6
  loop: start=0, step=1, limit=4
  $region2: #{tpu_custom_call.1} parent=0 // loop_pre_header
    _
  $region3: #{tpu_custom_call.1} parent=0 // loop_header
    %s11 = sphi 0, %s15
    %p12 = scmp.ge.s32.totalorder %s11, 4
    %s21 = sphi 0, %s23
    %s24 = sphi 0, %s21
    %s25 = sphi 0, %s24
    %s41 = sphi 0, %s25
    %s45 = sphi 0, %s45
    %s47 = sphi 0, %s45
    %s48 = sphi 0, %s47
    %s62 = sphi 0, %s48
    %s66 = sphi 0, %s66
    %s68 = sphi 0, %s66
    %s69 = sphi 0, %s68
    %s83 = sphi 0, %s69
    %s87 = sphi 0, %s87
    %s89 = sphi 0, %s87
    %s90 = sphi 0, %s89
    %s104 = sphi 0, %s90
    %s108 = sphi 0, %s108
    %s110 = sphi 0, %s108
    %s111 = sphi 0, %s110
    %s125 = sphi 0, %s111
    %s131 = sphi 0, %s133
    %s134 = sphi 0, %s131
    %s135 = sphi 0, %s134
    %s151 = sphi 0, %s135
  $region4: #{tpu_custom_call.1} parent=0 // loop_header_branch
    %14 = sbr.rel (%p12) target = $region8
  $region5: #{tpu_custom_call.1} parent=0 // loop_body
    %s16 = ssub.s32 %s11, 1
    %s17 = ssub.s32 %s11, 2
    %s18 = sadd.s32 %s11, 1
    %s19 = ssub.s32 %s11, %s18
    %p20 = scmp.eq.s32.totalorder %s19, 0
    %s22 = sadd.s32 %s21, 1
    %s23 = scalar_select %p20, %s21, %s22
    %p26 = pneg %p20
    %p27 = scmp.eq.s32.totalorder %s11, 1
    %p28 = por %p26, %p27
    %p29 = scmp.ne.s32.totalorder %s21, %s24
    %p30 = scmp.eq.s32.totalorder %s11, 0
    %p31 = por %p29, %p30
    %p32 = scmp.ne.s32.totalorder %s21, %s24
    %p33 = scmp.eq.s32.totalorder %s16, 1
    %p34 = por %p32, %p33
    %p35 = scmp.ne.s32.totalorder %s24, %s25
    %p36 = scmp.eq.s32.totalorder %s16, 0
    %p37 = por %p35, %p36
    %p38 = scmp.ne.s32.totalorder %s24, %s25
    %p39 = scmp.eq.s32.totalorder %s17, 1
    %p40 = por %p38, %p39
    %p42 = scmp.ne.s32.totalorder %s25, %s41
    %p43 = scmp.eq.s32.totalorder %s17, 0
    %p44 = por %p42, %p43
    %s46 = sadd.s32 %s45, 1
    %p49 = scmp.eq.s32.totalorder %s11, 1
    %p50 = scmp.ne.s32.totalorder %s45, %s47
    %p51 = scmp.eq.s32.totalorder %s11, 0
    %p52 = por %p50, %p51
    %p53 = scmp.ne.s32.totalorder %s45, %s47
    %p54 = scmp.eq.s32.totalorder %s16, 1
    %p55 = por %p53, %p54
    %p56 = scmp.ne.s32.totalorder %s47, %s48
    %p57 = scmp.eq.s32.totalorder %s16, 0
    %p58 = por %p56, %p57
    %p59 = scmp.ne.s32.totalorder %s47, %s48
    %p60 = scmp.eq.s32.totalorder %s17, 1
    %p61 = por %p59, %p60
    %p63 = scmp.ne.s32.totalorder %s48, %s62
    %p64 = scmp.eq.s32.totalorder %s17, 0
    %p65 = por %p63, %p64
    %s67 = sadd.s32 %s66, 1
    %p70 = scmp.eq.s32.totalorder %s11, 1
    %p71 = scmp.ne.s32.totalorder %s66, %s68
    %p72 = scmp.eq.s32.totalorder %s11, 0
    %p73 = por %p71, %p72
    %p74 = scmp.ne.s32.totalorder %s66, %s68
    %p75 = scmp.eq.s32.totalorder %s16, 1
    %p76 = por %p74, %p75
    %p77 = scmp.ne.s32.totalorder %s68, %s69
    %p78 = scmp.eq.s32.totalorder %s16, 0
    %p79 = por %p77, %p78
    %p80 = scmp.ne.s32.totalorder %s68, %s69
    %p81 = scmp.eq.s32.totalorder %s17, 1
    %p82 = por %p80, %p81
    %p84 = scmp.ne.s32.totalorder %s69, %s83
    %p85 = scmp.eq.s32.totalorder %s17, 0
    %p86 = por %p84, %p85
    %s88 = sadd.s32 %s87, 1
    %p91 = scmp.eq.s32.totalorder %s11, 1
    %p92 = scmp.ne.s32.totalorder %s87, %s89
    %p93 = scmp.eq.s32.totalorder %s11, 0
    %p94 = por %p92, %p93
    %p95 = scmp.ne.s32.totalorder %s87, %s89
    %p96 = scmp.eq.s32.totalorder %s16, 1
    %p97 = por %p95, %p96
    %p98 = scmp.ne.s32.totalorder %s89, %s90
    %p99 = scmp.eq.s32.totalorder %s16, 0
    %p100 = por %p98, %p99
    %p101 = scmp.ne.s32.totalorder %s89, %s90
    %p102 = scmp.eq.s32.totalorder %s17, 1
    %p103 = por %p101, %p102
    %p105 = scmp.ne.s32.totalorder %s90, %s104
    %p106 = scmp.eq.s32.totalorder %s17, 0
    %p107 = por %p105, %p106
    %s109 = sadd.s32 %s108, 1
    %p112 = scmp.eq.s32.totalorder %s11, 1
    %p113 = scmp.ne.s32.totalorder %s108, %s110
    %p114 = scmp.eq.s32.totalorder %s11, 0
    %p115 = por %p113, %p114
    %p116 = scmp.ne.s32.totalorder %s108, %s110
    %p117 = scmp.eq.s32.totalorder %s16, 1
    %p118 = por %p116, %p117
    %p119 = scmp.ne.s32.totalorder %s110, %s111
    %p120 = scmp.eq.s32.totalorder %s16, 0
    %p121 = por %p119, %p120
    %p122 = scmp.ne.s32.totalorder %s110, %s111
    %p123 = scmp.eq.s32.totalorder %s17, 1
    %p124 = por %p122, %p123
    %p126 = scmp.ne.s32.totalorder %s111, %s125
    %p127 = scmp.eq.s32.totalorder %s17, 0
    %p128 = por %p126, %p127
    %s129 = ssub.s32 %s11, %s18
    %p130 = scmp.eq.s32.totalorder %s129, 0
    %s132 = sadd.s32 %s131, 1
    %s133 = scalar_select %p130, %s131, %s132
    %p136 = pneg %p130
    %p137 = scmp.eq.s32.totalorder %s11, 1
    %p138 = por %p136, %p137
    %p139 = scmp.ne.s32.totalorder %s131, %s134
    %p140 = scmp.eq.s32.totalorder %s11, 0
    %p141 = por %p139, %p140
    %p142 = scmp.ne.s32.totalorder %s131, %s134
    %p143 = scmp.eq.s32.totalorder %s16, 1
    %p144 = por %p142, %p143
    %p145 = scmp.ne.s32.totalorder %s134, %s135
    %p146 = scmp.eq.s32.totalorder %s16, 0
    %p147 = por %p145, %p146
    %p148 = scmp.ne.s32.totalorder %s134, %s135
    %p149 = scmp.eq.s32.totalorder %s17, 1
    %p150 = por %p148, %p149
    %p152 = scmp.ne.s32.totalorder %s135, %s151
    %p153 = scmp.eq.s32.totalorder %s17, 0
    %p154 = por %p152, %p153
    %p155 = scmp.le.s32.totalorder 1, %s11
    %p156 = scmp.lt.s32.totalorder %s11, 3
    %p157 = pnand %p155, %p156
    %p158 = pneg %p157
    // Predicated region
    $region9: #{tpu_custom_call.1} parent=5 // pred_check
      _
    $region10: #{tpu_custom_call.1} parent=5 // pred_check_branch
      %160 = sbr.rel (%p157) target = $region12
    $region11: #{tpu_custom_call.1} parent=5 // pred_region
      %s161 = ssub.s32 %s11, 1
      // Predicated region
      $region13: #{tpu_custom_call.1} parent=11 // pred_check
        %p162 = pneg %p58
      $region14: #{tpu_custom_call.1} parent=11 // pred_check_branch
        %164 = sbr.rel (%p162) target = $region16
      $region15: #{tpu_custom_call.1} parent=11 // pred_region
        _
      $region16: #{tpu_custom_call.1} parent=11 // pred_fallthru
        _
      // Predicated region
      $region17: #{tpu_custom_call.1} parent=11 // pred_check
        %p165 = pneg %p79
      $region18: #{tpu_custom_call.1} parent=11 // pred_check_branch
        %167 = sbr.rel (%p165) target = $region20
      $region19: #{tpu_custom_call.1} parent=11 // pred_region
        _
      $region20: #{tpu_custom_call.1} parent=11 // pred_fallthru
        _
      // Predicated region
      $region21: #{tpu_custom_call.1} parent=11 // pred_check
        %p168 = pneg %p100
      $region22: #{tpu_custom_call.1} parent=11 // pred_check_branch
        %170 = sbr.rel (%p168) target = $region24
      $region23: #{tpu_custom_call.1} parent=11 // pred_region
        _
      $region24: #{tpu_custom_call.1} parent=11 // pred_fallthru
        _
      // Predicated region
      $region25: #{tpu_custom_call.1} parent=11 // pred_check
        %p171 = pneg %p121
      $region26: #{tpu_custom_call.1} parent=11 // pred_check_branch
        %173 = sbr.rel (%p171) target = $region28
      $region27: #{tpu_custom_call.1} parent=11 // pred_region
        _
      $region28: #{tpu_custom_call.1} parent=11 // pred_fallthru
        _
    $region12: #{tpu_custom_call.1} parent=5 // pred_fallthru
      _
    %p174 = scmp.lt.s32.totalorder %s11, 2
    // Predicated region
    $region29: #{tpu_custom_call.1} parent=5 // pred_check
      %p175 = pneg %p174
    $region30: #{tpu_custom_call.1} parent=5 // pred_check_branch
      %177 = sbr.rel (%p175) target = $region32
    $region31: #{tpu_custom_call.1} parent=5 // pred_region
      // Predicated region
      $region33: #{tpu_custom_call.1} parent=31 // pred_check
        %p178 = pneg %p31
      $region34: #{tpu_custom_call.1} parent=31 // pred_check_branch
        %180 = sbr.rel (%p178) target = $region36
      $region35: #{tpu_custom_call.1} parent=31 // pred_region
        %p181 = scmp.lt.s32.totalorder %s11, 1
        %s182 = scalar_select %p181, %s11, 1
        %s183 = smul.addr %s182, 64
        %s184 = smul.addr %s183, 4
        %s185 = scalar_lea.vmem %s0, %s184
      $region36: #{tpu_custom_call.1} parent=31 // pred_fallthru
        _
    $region32: #{tpu_custom_call.1} parent=5 // pred_fallthru
      _
    %p186 = scmp.le.s32.totalorder 1, %s11
    %p187 = scmp.lt.s32.totalorder %s11, 3
    %p188 = pnand %p186, %p187
    %p189 = pneg %p188
    // Predicated region
    $region37: #{tpu_custom_call.1} parent=5 // pred_check
      _
    $region38: #{tpu_custom_call.1} parent=5 // pred_check_branch
      %191 = sbr.rel (%p188) target = $region40
    $region39: #{tpu_custom_call.1} parent=5 // pred_region
      %s192 = ssub.s32 %s11, 1
      %p193 = scmp.lt.s32.totalorder %s16, 1
      %s194 = scalar_select %p193, %s16, 1
      %s195 = smul.addr %s194, 64
      %s196 = smul.addr %s195, 4
      %s197 = scalar_lea.vmem %s0, %s196
      %p198 = pneg %p37
      %p199 = pneg %p34
      %p200 = pneg %p58
      %p201 = pneg %p55
      %p202 = pneg %p79
      %p203 = pneg %p76
      %p204 = pneg %p100
      %p205 = pneg %p97
      %p206 = pneg %p121
      %p207 = pneg %p118
      %p208 = pneg %p147
      %p209 = pneg %p144
      %p210 = scmp.lt.s32.totalorder %s16, 1
      %s211 = scalar_select %p210, %s16, 1
      %s212 = smul.addr %s211, 2
      %s213 = smul.addr %s212, 8
      %s214 = scalar_lea.vmem %s5, %s213
      %p215 = scmp.lt.s32.totalorder %s16, 1
      %s216 = scalar_select %p215, %s16, 1
      %s217 = smul.addr %s216, 64
      %s218 = smul.addr %s217, 4
      %s219 = scalar_lea.vmem %s0, %s218
      %p220 = scmp.lt.s32.totalorder %s16, 1
      %s221 = scalar_select %p220, %s16, 1
      %s222 = smul.addr %s221, 2
      %s223 = smul.addr %s222, 8
      %s224 = scalar_lea.vmem %s5, %s223
      %v225 = vld [vmem:[%s219] sm:$0xf]
      %v226 = vld [vmem:[%s219 + $0x4] sm:$0xf]
      %v227 = vld [vmem:[%s219 + $0x8] sm:$0xf]
      %v228 = vld [vmem:[%s219 + $0xc] sm:$0xf]
      %v229 = vld [vmem:[%s1] sm:$0x1]
      %v230 = vperm.slane %v229, 0
      %v231 = vmul.f32 %v225, %v230
      %v232 = vmul.f32 %v226, %v230
      %v233 = vmul.f32 %v227, %v230
      %v234 = vmul.f32 %v228, %v230
      %v235 = vadd.f32 %v231, 0.0
      %v236 = vadd.f32 %v232, 0.0
      %v237 = vadd.f32 %v233, 0.0
      %v238 = vadd.f32 %v234, 0.0
      %s239 = scalar_lea.vmem %s219, 16
      %v240 = vld [vmem:[%s239] sm:$0xf]
      %v241 = vld [vmem:[%s239 + $0x4] sm:$0xf]
      %v242 = vld [vmem:[%s239 + $0x8] sm:$0xf]
      %v243 = vld [vmem:[%s239 + $0xc] sm:$0xf]
      %v244 = vld [vmem:[%s1 + $0x1] sm:$0x1]
      %v245 = vperm.slane %v244, 0
      %v246 = vmul.f32 %v240, %v245
      %v247 = vmul.f32 %v241, %v245
      %v248 = vmul.f32 %v242, %v245
      %v249 = vmul.f32 %v243, %v245
      %v250 = vadd.f32 %v235, %v246
      %v251 = vadd.f32 %v236, %v247
      %v252 = vadd.f32 %v237, %v248
      %v253 = vadd.f32 %v238, %v249
      %s254 = scalar_lea.vmem %s219, 32
      %v255 = vld [vmem:[%s254] sm:$0xf]
      %v256 = vld [vmem:[%s254 + $0x4] sm:$0xf]
      %v257 = vld [vmem:[%s254 + $0x8] sm:$0xf]
      %v258 = vld [vmem:[%s254 + $0xc] sm:$0xf]
      %v259 = vld [vmem:[%s1 + $0x2] sm:$0x1]
      %v260 = vperm.slane %v259, 0
      %v261 = vmul.f32 %v255, %v260
      %v262 = vmul.f32 %v256, %v260
      %v263 = vmul.f32 %v257, %v260
      %v264 = vmul.f32 %v258, %v260
      %v265 = vadd.f32 %v250, %v261
      %v266 = vadd.f32 %v251, %v262
      %v267 = vadd.f32 %v252, %v263
      %v268 = vadd.f32 %v253, %v264
      %s269 = scalar_lea.vmem %s219, 64
      %v270 = vld [vmem:[%s269] sm:$0xf]
      %v271 = vld [vmem:[%s269 + $0x4] sm:$0xf]
      %v272 = vld [vmem:[%s269 + $0x8] sm:$0xf]
      %v273 = vld [vmem:[%s269 + $0xc] sm:$0xf]
      %s274 = scalar_lea.vmem %s1, 4
      %v275 = vld [vmem:[%s274] sm:$0x1]
      %v276 = vperm.slane %v275, 0
      %v277 = vmul.f32 %v270, %v276
      %v278 = vmul.f32 %v271, %v276
      %v279 = vmul.f32 %v272, %v276
      %v280 = vmul.f32 %v273, %v276
      %v281 = vadd.f32 %v265, %v277
      %v282 = vadd.f32 %v266, %v278
      %v283 = vadd.f32 %v267, %v279
      %v284 = vadd.f32 %v268, %v280
      %s285 = scalar_lea.vmem %s219, 80
      %v286 = vld [vmem:[%s285] sm:$0xf]
      %v287 = vld [vmem:[%s285 + $0x4] sm:$0xf]
      %v288 = vld [vmem:[%s285 + $0x8] sm:$0xf]
      %v289 = vld [vmem:[%s285 + $0xc] sm:$0xf]
      %v290 = vld [vmem:[%s274 + $0x1] sm:$0x1]
      %v291 = vperm.slane %v290, 0
      %v292 = vmul.f32 %v286, %v291
      %v293 = vmul.f32 %v287, %v291
      %v294 = vmul.f32 %v288, %v291
      %v295 = vmul.f32 %v289, %v291
      %v296 = vadd.f32 %v281, %v292
      %v297 = vadd.f32 %v282, %v293
      %v298 = vadd.f32 %v283, %v294
      %v299 = vadd.f32 %v284, %v295
      %s300 = scalar_lea.vmem %s219, 96
      %v301 = vld [vmem:[%s300] sm:$0xf]
      %v302 = vld [vmem:[%s300 + $0x4] sm:$0xf]
      %v303 = vld [vmem:[%s300 + $0x8] sm:$0xf]
      %v304 = vld [vmem:[%s300 + $0xc] sm:$0xf]
      %v305 = vld [vmem:[%s274 + $0x2] sm:$0x1]
      %v306 = vperm.slane %v305, 0
      %v307 = vmul.f32 %v301, %v306
      %v308 = vmul.f32 %v302, %v306
      %v309 = vmul.f32 %v303, %v306
      %v310 = vmul.f32 %v304, %v306
      %v311 = vadd.f32 %v296, %v307
      %v312 = vadd.f32 %v297, %v308
      %v313 = vadd.f32 %v298, %v309
      %v314 = vadd.f32 %v299, %v310
      %s315 = scalar_lea.vmem %s219, 128
      %v316 = vld [vmem:[%s315] sm:$0xf]
      %v317 = vld [vmem:[%s315 + $0x4] sm:$0xf]
      %v318 = vld [vmem:[%s315 + $0x8] sm:$0xf]
      %v319 = vld [vmem:[%s315 + $0xc] sm:$0xf]
      %s320 = scalar_lea.vmem %s1, 8
      %v321 = vld [vmem:[%s320] sm:$0x1]
      %v322 = vperm.slane %v321, 0
      %v323 = vmul.f32 %v316, %v322
      %v324 = vmul.f32 %v317, %v322
      %v325 = vmul.f32 %v318, %v322
      %v326 = vmul.f32 %v319, %v322
      %v327 = vadd.f32 %v311, %v323
      %v328 = vadd.f32 %v312, %v324
      %v329 = vadd.f32 %v313, %v325
      %v330 = vadd.f32 %v314, %v326
      %s331 = scalar_lea.vmem %s219, 144
      %v332 = vld [vmem:[%s331] sm:$0xf]
      %v333 = vld [vmem:[%s331 + $0x4] sm:$0xf]
      %v334 = vld [vmem:[%s331 + $0x8] sm:$0xf]
      %v335 = vld [vmem:[%s331 + $0xc] sm:$0xf]
      %v336 = vld [vmem:[%s320 + $0x1] sm:$0x1]
      %v337 = vperm.slane %v336, 0
      %v338 = vmul.f32 %v332, %v337
      %v339 = vmul.f32 %v333, %v337
      %v340 = vmul.f32 %v334, %v337
      %v341 = vmul.f32 %v335, %v337
      %v342 = vadd.f32 %v327, %v338
      %v343 = vadd.f32 %v328, %v339
      %v344 = vadd.f32 %v329, %v340
      %v345 = vadd.f32 %v330, %v341
      %s346 = scalar_lea.vmem %s219, 160
      %v347 = vld [vmem:[%s346] sm:$0xf]
      %v348 = vld [vmem:[%s346 + $0x4] sm:$0xf]
      %v349 = vld [vmem:[%s346 + $0x8] sm:$0xf]
      %v350 = vld [vmem:[%s346 + $0xc] sm:$0xf]
      %v351 = vld [vmem:[%s320 + $0x2] sm:$0x1]
      %v352 = vperm.slane %v351, 0
      %v353 = vmul.f32 %v347, %v352
      %v354 = vmul.f32 %v348, %v352
      %v355 = vmul.f32 %v349, %v352
      %v356 = vmul.f32 %v350, %v352
      %v357 = vadd.f32 %v342, %v353
      %v358 = vadd.f32 %v343, %v354
      %v359 = vadd.f32 %v344, %v355
      %v360 = vadd.f32 %v345, %v356
      %v361 = vld [vmem:[%s2] sm:$0x1]
      %v363 = vperm.slane %v361, 0
      %v365 = vadd.f32 %v357, %v363
      %v366 = vadd.f32 %v358, %v363
      %v367 = vadd.f32 %v359, %v363
      %v368 = vadd.f32 %v360, %v363
      %v369 = vmax.f32 %v365, 0.0
      %v370 = vmax.f32 %v366, 0.0
      %v371 = vmax.f32 %v367, 0.0
      %v372 = vmax.f32 %v368, 0.0
      %v373 = vld [vmem:[%s3] sm:$0xf]
      %v374 = vld [vmem:[%s4] sm:$0x1]
      %v376 = vperm.slane %v374, 0
      %382 = vst [vmem:[#allocation1] ss:$2 sm:$0xff] %v369
      %s383 = scalar_lea.vmem [#allocation1], 1
      %384 = vst [vmem:[%s383] ss:$2 sm:$0xff] %v370
      %s385 = scalar_lea.vmem [#allocation1], 16
      %386 = vst [vmem:[%s385] ss:$2 sm:$0xff] %v371
      %s387 = scalar_lea.vmem [#allocation1], 17
      %388 = vst [vmem:[%s387] ss:$2 sm:$0xff] %v372
      %v389 = vld.sshfl [vmem:[#allocation1] sm:$0xff pattern:$0x75316420]
      %v390 = vld.sshfl [vmem:[#allocation1 + $0x10] sm:$0xff pattern:$0x75316420]
      %vm391 = vcmask 31744
      %v392 = vsel %vm391, %v389, 0
      %v394 = vsel %vm391, %v390, 0
      %vm396 = vcmask 1043456
      %v398 = vsel %vm396, %v373, 0
      %400 = vmatpush.msra.mxu0 0.0
      %401 = vmatpush.msra.mxu0 0.0
      %402 = vmatpush.msra.mxu0 0.0
      %403 = vmatpush.msra.mxu0 0.0
      %404 = vmatpush.msra.mxu0 0.0
      %405 = vmatpush.msra.mxu0 0.0
      %406 = vmatpush.msra.mxu0 0.0
      %407 = vmatpush.msra.mxu0 0.0
      %408 = vmatpush.msra.mxu0 0.0
      %409 = vmatpush.msra.mxu0 0.0
      %410 = vmatpush.msra.mxu0 0.0
      %411 = vmatpush.msra.mxu0 0.0
      %412 = vmatpush.msra.mxu0 0.0
      %413 = vmatpush.msra.mxu0 0.0
      %414 = vmatpush.msra.mxu0 0.0
      %415 = vmatpush.msra.mxu0 %v398
      %416 = vmatmul.f32.gmra.mxu0 %v392
      %v417 = vpop.f32.mrf.mxu0
      %v418 = vadd.f32 %v376, %v417
      %419 = vmatmul.f32.gmra.mxu0 %v394
      %v420 = vpop.f32.mrf.mxu0
      %v421 = vadd.f32 %v376, %v420
      %422 = vdwg.mxu0
      %v423 = vmax.f32 %v418, 0.0
      %v424 = vmax.f32 %v421, 0.0
      %vm425 = vcmask 64512
      %426 = vst.msk [vmem:[%s224] sm:$0xff] %vm425, %v423
      %427 = vst.msk [vmem:[%s224 + $0x8] sm:$0xff] %vm425, %v424
      %p428 = scmp.lt.s32.totalorder %s16, 1
      %s429 = scalar_select %p428, %s16, 1
      %s430 = smul.addr %s429, 2
      %s431 = smul.addr %s430, 8
      %s432 = scalar_lea.vmem %s5, %s431
      // Predicated region
      $region41: #{tpu_custom_call.1} parent=39 // pred_check
        %p433 = pneg %p144
      $region42: #{tpu_custom_call.1} parent=39 // pred_check_branch
        %435 = sbr.rel (%p433) target = $region44
      $region43: #{tpu_custom_call.1} parent=39 // pred_region
        _
      $region44: #{tpu_custom_call.1} parent=39 // pred_fallthru
        _
    $region40: #{tpu_custom_call.1} parent=5 // pred_fallthru
      _
    %p436 = scmp.le.s32.totalorder 2, %s11
    // Predicated region
    $region45: #{tpu_custom_call.1} parent=5 // pred_check
      %p437 = pneg %p436
    $region46: #{tpu_custom_call.1} parent=5 // pred_check_branch
      %439 = sbr.rel (%p437) target = $region48
    $region47: #{tpu_custom_call.1} parent=5 // pred_region
      %s440 = ssub.s32 %s11, 2
      // Predicated region
      $region49: #{tpu_custom_call.1} parent=47 // pred_check
        %p441 = pneg %p150
      $region50: #{tpu_custom_call.1} parent=47 // pred_check_branch
        %443 = sbr.rel (%p441) target = $region52
      $region51: #{tpu_custom_call.1} parent=47 // pred_region
        %p444 = scmp.lt.s32.totalorder %s17, 1
        %s445 = scalar_select %p444, %s17, 1
        %s446 = smul.addr %s445, 2
        %s447 = smul.addr %s446, 8
        %s448 = scalar_lea.vmem %s5, %s447
      $region52: #{tpu_custom_call.1} parent=47 // pred_fallthru
        _
    $region48: #{tpu_custom_call.1} parent=5 // pred_fallthru
      _
  $region6: #{tpu_custom_call.1} parent=0 // loop_footer
    %s15 = sadd.s32 1, %s11
  $region7: #{tpu_custom_call.1} parent=0 // loop_footer_branch
    %10 = sbr.rel target = $region3
  $region8: #{tpu_custom_call.1} parent=0 // loop_exit
    _

</llo_original>
